<compile_context>
chip_gen: v5e
topology: v5e:2x2
jax: 0.10.0
libtpu: 0.0.40
codegen_flags: <defaults>
</compile_context>

<pallas_src>
import functools

import jax
import jax.numpy as jnp
from jax.experimental import pallas as pl
from jax.experimental.pallas import tpu as pltpu


def gcf_signal_kernel(adj_ref, *refs, num_layers: int, inv_scale: float,
                      compute_dtype):
    """L rounds of GCN smoothing + mean over [E_0..E_L] for one D-slab.

    adj_ref:  (N, N) VMEM-resident normalized adjacency (compute_dtype).
    refs:     one or more embedding row-blocks (..., tile_d) followed by the
              (N, tile_d) output block.
    """
    *part_refs, out_ref = refs
    adj = adj_ref[...]                                     # (N, N)
    parts = [r[...].astype(jnp.float32) for r in part_refs]
    # Stack user/item row blocks inside VMEM (avoids a host-side HBM concat).
    cur = parts[0] if len(parts) == 1 else jnp.concatenate(parts, axis=0)
    acc = cur                                              # running sum, f32
    for _ in range(num_layers):                            # static unroll
        cur = jnp.dot(adj, cur.astype(compute_dtype),
                      preferred_element_type=jnp.float32)
        acc = acc + cur
    out_ref[...] = (acc * inv_scale).astype(out_ref.dtype)


def gcf_signal(u_embs, i_embs, adj_norm, *, num_layers: int = 2,
               tile_d: int | None = None, use_bf16: bool = True):
    """Pallas implementation of GCFSignal.forward.

    u_embs:   (U, D) user embeddings
    i_embs:   (I, D) item embeddings
    adj_norm: (N, N) symmetric-normalized bipartite adjacency, N = U + I
              (the dense matrix ui_bigraph.smoothing_with_GCN multiplies by).
    tile_d:   D-slab width per grid step.  Default: auto (largest that fits a
              conservative VMEM budget).  On v7x, pass D//2 to engage both
              TensorCores via the 'parallel' D axis.
    """
    U, D = u_embs.shape
    I, Di = i_embs.shape
    assert Di == D, "user/item embedding dims must match"
    N = U + I
    assert adj_norm.shape == (N, N)

    compute_dtype = jnp.bfloat16 if use_bf16 else jnp.float32
    adj = adj_norm.astype(compute_dtype)                   # one-time cast
    adj_bytes = N * N * jnp.dtype(compute_dtype).itemsize  # single-buffered

    # In-kernel row concat needs f32-sublane-aligned parts; else fall back to a
    # single pre-concatenated table.
    SUBLANE = 8
    if U % SUBLANE == 0 and I % SUBLANE == 0:
        parts = [u_embs, i_embs]
    else:
        parts = [jnp.concatenate([u_embs, i_embs], axis=0)]

    def vmem_estimate(t):
        io = 2 * N * t * 4 + 2 * N * t * 4    # double-buffered f32 in + out blocks
        tmp = 4 * N * t * 4                   # E_0 / cur / acc / cast temporaries
        return adj_bytes + io + tmp

    if tile_d is None:
        budget = 48 * (1 << 20)               # fits v7x's smaller VMEM too
        cands = [D]
        if D % 128 == 0:
            cands += [t for t in range(D - 128, 0, -128) if D % t == 0]
        tile_d = next((t for t in cands if vmem_estimate(t) <= budget), cands[-1])
    tile_d = min(tile_d, D)
    assert D % tile_d == 0, "D must be divisible by tile_d"

    vmem_limit = int(min(112 << 20, max(vmem_estimate(tile_d) + (4 << 20),
                                        16 << 20)))

    kernel = functools.partial(
        gcf_signal_kernel,
        num_layers=num_layers,
        inv_scale=1.0 / float(num_layers + 1),
        compute_dtype=compute_dtype,
    )

    part_specs = [pl.BlockSpec((p.shape[0], tile_d), lambda j: (0, j))
                  for p in parts]

    return pl.pallas_call(
        kernel,
        out_shape=jax.ShapeDtypeStruct((N, D), u_embs.dtype),
        grid_spec=pltpu.PrefetchScalarGridSpec(
            num_scalar_prefetch=0,
            grid=(D // tile_d,),
            in_specs=[
                # adjacency: whole array resident in VMEM once, no pipelining,
                # no double buffer (it is grid-invariant).
                pl.BlockSpec(memory_space=pltpu.MemorySpace.VMEM),
                *part_specs,
            ],
            out_specs=pl.BlockSpec((N, tile_d), lambda j: (0, j)),
        ),
        compiler_params=pltpu.CompilerParams(
            dimension_semantics=("parallel",),
            vmem_limit_bytes=vmem_limit,
        ),
    )(adj, *parts)


def _build_normalized_bipartite_adjacency(interactions):
    """D^{-1/2} A D^{-1/2} for A = [[0, R], [R^T, 0]] (LightGCN normalization)."""
    U, I = interactions.shape
    N = U + I
    adj = jnp.zeros((N, N), dtype=jnp.float32)
    adj = adj.at[:U, U:].set(interactions)
    adj = adj.at[U:, :U].set(interactions.T)
    deg = jnp.sum(adj, axis=1)
    d_inv_sqrt = jnp.where(deg > 0, 1.0 / jnp.sqrt(jnp.maximum(deg, 1e-12)), 0.0)
    return d_inv_sqrt[:, None] * adj * d_inv_sqrt[None, :]


def _reference(u_embs, i_embs, adj_norm, num_layers=2, compute_dtype=jnp.float32):
    """Pure-JAX reference mirroring the PyTorch forward (optionally bf16-matched)."""
    all_embs = jnp.concatenate([u_embs, i_embs], axis=0)
    adj = adj_norm.astype(compute_dtype)
    embs_list = [all_embs]
    cur = all_embs
    for _ in range(num_layers):
        cur = jnp.dot(adj, cur.astype(compute_dtype),
                      preferred_element_type=jnp.float32)
        embs_list.append(cur)
    return jnp.mean(jnp.stack(embs_list, axis=1), axis=1)


if __name__ == "__main__":
    NUM_USERS = 24
    NUM_ITEMS = 40
    EMB_DIM = 256
    NUM_LAYERS = 2

    key = jax.random.PRNGKey(0)
    k_u, k_i, k_r = jax.random.split(key, 3)

    u_embs = jax.random.normal(k_u, (NUM_USERS, EMB_DIM), dtype=jnp.float32)
    i_embs = jax.random.normal(k_i, (NUM_ITEMS, EMB_DIM), dtype=jnp.float32)
    interactions = jax.random.bernoulli(
        k_r, p=0.2, shape=(NUM_USERS, NUM_ITEMS)).astype(jnp.float32)
    adj_norm = _build_normalized_bipartite_adjacency(interactions)

    out = gcf_signal(u_embs, i_embs, adj_norm, num_layers=NUM_LAYERS)
    out = jax.block_until_ready(out)
    assert out.shape == (NUM_USERS + NUM_ITEMS, EMB_DIM)

    # bf16-matched reference (same dtype path as the kernel) -> tight check.
    ref_matched = _reference(u_embs, i_embs, adj_norm, NUM_LAYERS, jnp.bfloat16)
    assert jnp.allclose(out, ref_matched, atol=2e-3, rtol=2e-3), \
        "mismatch vs bf16-matched reference"

    # full-f32 reference -> semantic sanity check with bf16-sized tolerance.
    ref_f32 = _reference(u_embs, i_embs, adj_norm, NUM_LAYERS, jnp.float32)
    assert jnp.allclose(out, ref_f32, atol=5e-2, rtol=5e-2), \
        "mismatch vs f32 reference"

    print("KERNEL_OK")
</pallas_src>

<mosaic_0001>
module attributes {stable_mosaic.version = 11 : i64} {
  func.func @gcf_signal_kernel(%arg0: i32, %arg1: memref<64x64xbf16, #tpu.memory_space<vmem>>, %arg2: memref<24x256xf32, #tpu.memory_space<vmem>>, %arg3: memref<40x256xf32, #tpu.memory_space<vmem>>, %arg4: memref<64x256xf32, #tpu.memory_space<vmem>>) attributes {dimension_semantics = [#tpu.dimension_semantics<parallel>], iteration_bounds = array<i64: 1>, scalar_prefetch = 0 : i64, scratch_operands = 0 : i64, tpu.core_type = #tpu.core_type<tc>, window_params = [{pipeline_mode = #tpu.pipeline_mode<synchronous>, transform_indices = @transform_0, window_bounds = array<i64: 64, 64>}, {transform_indices = @transform_1, window_bounds = array<i64: 24, 256>}, {transform_indices = @transform_2, window_bounds = array<i64: 40, 256>}, {transform_indices = @transform_3, window_bounds = array<i64: 64, 256>}]} {
    %c0 = arith.constant 0 : index
    %c0_0 = arith.constant 0 : index
    %0 = vector.load %arg1[%c0, %c0_0] : memref<64x64xbf16, #tpu.memory_space<vmem>>, vector<64x64xbf16>
    %c0_1 = arith.constant 0 : index
    %c0_2 = arith.constant 0 : index
    %1 = vector.load %arg2[%c0_1, %c0_2] : memref<24x256xf32, #tpu.memory_space<vmem>>, vector<24x256xf32>
    %c0_3 = arith.constant 0 : index
    %c0_4 = arith.constant 0 : index
    %2 = vector.load %arg3[%c0_3, %c0_4] : memref<40x256xf32, #tpu.memory_space<vmem>>, vector<40x256xf32>
    %3 = tpu.concatenate %1, %2 in 0 : vector<24x256xf32>, vector<40x256xf32> -> vector<64x256xf32>
    %4 = arith.truncf %3 : vector<64x256xf32> to vector<64x256xbf16>
    %cst = arith.constant dense<0.000000e+00> : vector<64x256xf32>
    %5 = tpu.matmul %0, %4, %cst {dimension_numbers = #tpu.dot_dimension_numbers<[1], [0], [0], [1], [0, 0, 1, 1], [], []>} : vector<64x64xbf16>, vector<64x256xbf16>, vector<64x256xf32> -> vector<64x256xf32>
    %6 = arith.addf %3, %5 : vector<64x256xf32>
    %7 = arith.truncf %5 : vector<64x256xf32> to vector<64x256xbf16>
    %cst_5 = arith.constant dense<0.000000e+00> : vector<64x256xf32>
    %8 = tpu.matmul %0, %7, %cst_5 {dimension_numbers = #tpu.dot_dimension_numbers<[1], [0], [0], [1], [0, 0, 1, 1], [], []>} : vector<64x64xbf16>, vector<64x256xbf16>, vector<64x256xf32> -> vector<64x256xf32>
    %9 = arith.addf %6, %8 : vector<64x256xf32>
    %cst_6 = arith.constant 0.333333343 : f32
    %10 = vector.broadcast %cst_6 : f32 to vector<64x256xf32>
    %11 = arith.mulf %9, %10 : vector<64x256xf32>
    %c0_7 = arith.constant 0 : index
    %c0_8 = arith.constant 0 : index
    %12 = vector.load %arg4[%c0_7, %c0_8] : memref<64x256xf32, #tpu.memory_space<vmem>>, vector<64x256xf32>
    tpu.vector_store %arg4[%c0_7, %c0_8], %11 {strides = array<i32>} : memref<64x256xf32, #tpu.memory_space<vmem>>, vector<64x256xf32>,
    return
  }
  func.func @transform_0(%arg0: i32) -> (i32, i32) {
    %c0_i32 = arith.constant 0 : i32
    %c0_i32_0 = arith.constant 0 : i32
    %c0_i32_1 = arith.constant 0 : i32
    return %c0_i32, %c0_i32_0 : i32, i32
  }
  func.func @transform_1(%arg0: i32) -> (i32, i32) {
    %c0_i32 = arith.constant 0 : i32
    %c0_i32_0 = arith.constant 0 : i32
    return %c0_i32, %arg0 : i32, i32
  }
  func.func @transform_2(%arg0: i32) -> (i32, i32) {
    %c0_i32 = arith.constant 0 : i32
    %c0_i32_0 = arith.constant 0 : i32
    return %c0_i32, %arg0 : i32, i32
  }
  func.func @transform_3(%arg0: i32) -> (i32, i32) {
    %c0_i32 = arith.constant 0 : i32
    %c0_i32_0 = arith.constant 0 : i32
    return %c0_i32, %arg0 : i32, i32
  }
}

</mosaic_0001>

<llo_original>
// kernel: tpu_custom_call.1
$region0: #{tpu_custom_call.1}
  #allocation0 [shape = 'u32[]', space=smem, size = 0x4, offset = 0x4, fixed_abs, tag = 'smem constant byte address 0x4 - core index']
  #allocation1 [shape = 'u32[72,128]{1,0:T(1,128)}', space=vmem, size = 0x9000, scoped, tag = 'internal scratch']
  %s0 = inlined_call_operand.hbm [shape: bf16[64,64], index: 0, kind: input, shape index: {}]
  %s1 = inlined_call_operand.hbm [shape: f32[24,256], index: 1, kind: input, shape index: {}]
  %s2 = inlined_call_operand.hbm [shape: f32[40,256], index: 2, kind: input, shape index: {}]
  %s3 = inlined_call_operand.hbm [shape: f32[64,256], index: 3, kind: output, shape index: {}]
  %s4 = sld [smem:[#allocation0]]
  $region34: #{tpu_custom_call.1} parent=0
    _
  %s6 = ssub.s32 1, %s4
  %s7 = scalar_select 0, %s6, %s4
  $region1: #{tpu_custom_call.1} parent=0
    #allocation2 [shape = 'u8[16384]{0}', space=vmem, size = 0x4000, scoped, tag = 'input window, operand 0, single buffered']
    #allocation3 [shape = 's32[1]{0}', space=sflag, size = 0x4, scoped, tag = 'scoped memory for tpu_custom_call.1']
    #allocation4 [shape = 's32[1]{0}', space=sflag, size = 0x4, scoped, tag = 'scoped memory for tpu_custom_call.1']
    #allocation5 [shape = 'u8[24576]{0}', space=vmem, size = 0x6000, scoped, tag = 'input window, operand 1, single buffered']
    #allocation6 [shape = 's32[1]{0}', space=sflag, size = 0x4, scoped, tag = 'scoped memory for tpu_custom_call.1']
    #allocation7 [shape = 'u8[40960]{0}', space=vmem, size = 0xa000, scoped, tag = 'input window, operand 2, single buffered']
    #allocation8 [shape = 'u8[65536]{0}', space=vmem, size = 0x10000, scoped, tag = 'output window, operand 0, single buffered']
    %8 = vsyncpa [#allocation3], 0
    %9 = vsyncpa [#allocation6], 0
    %10 = vsyncpa [#allocation4], 0
    // Predicated region
    $region2: #{tpu_custom_call.1} parent=1 // pred_check
      _
    $region3: #{tpu_custom_call.1} parent=1 // pred_check_branch
      %12 = sbr.rel (0) target = $region5
    $region4: #{tpu_custom_call.1} parent=1 // pred_region
      %14 = vsyncadd [#allocation3], 0
      %s15 = sshll.u32 %s0, 4
      %s16 = int_to_ptr.hbm [resolvable:$true] %s15
      %s17 = sshll.u32 [#allocation2], 4
      %s18 = int_to_ptr.vmem [resolvable:$true] %s17
      %23 = dma.hbm_to_vmem [thread:$0]  %s16, 512, %s18, [#allocation3], 64, 64, 4
    $region5: #{tpu_custom_call.1} parent=1 // pred_fallthru
      _
    // Predicated region
    $region6: #{tpu_custom_call.1} parent=1 // pred_check
      _
    $region7: #{tpu_custom_call.1} parent=1 // pred_check_branch
      %25 = sbr.rel (0) target = $region9
    $region8: #{tpu_custom_call.1} parent=1 // pred_region
      %27 = vsyncadd [#allocation6], 0
      %s28 = sshll.u32 %s1, 4
      %s29 = int_to_ptr.hbm [resolvable:$true] %s28
      %s30 = sshll.u32 [#allocation5], 4
      %s31 = int_to_ptr.vmem [resolvable:$true] %s30
      %36 = dma.hbm_to_vmem [thread:$0]  %s29, 768, %s31, [#allocation6], 256, 256, 16
    $region9: #{tpu_custom_call.1} parent=1 // pred_fallthru
      _
    // Predicated region
    $region10: #{tpu_custom_call.1} parent=1 // pred_check
      _
    $region11: #{tpu_custom_call.1} parent=1 // pred_check_branch
      %38 = sbr.rel (0) target = $region13
    $region12: #{tpu_custom_call.1} parent=1 // pred_region
      %40 = vsyncadd [#allocation6], 0
      %s41 = sshll.u32 %s2, 4
      %s42 = int_to_ptr.hbm [resolvable:$true] %s41
      %s43 = sshll.u32 [#allocation7], 4
      %s44 = int_to_ptr.vmem [resolvable:$true] %s43
      %49 = dma.hbm_to_vmem [thread:$0]  %s42, 1280, %s44, [#allocation6], 256, 256, 16
    $region13: #{tpu_custom_call.1} parent=1 // pred_fallthru
      _
    // Predicated region
    $region14: #{tpu_custom_call.1} parent=1 // pred_check
      _
    $region15: #{tpu_custom_call.1} parent=1 // pred_check_branch
      %51 = sbr.rel (0) target = $region17
    $region16: #{tpu_custom_call.1} parent=1 // pred_region
      %53 = dma.done [#allocation3], 512
    $region17: #{tpu_custom_call.1} parent=1 // pred_fallthru
      _
    // Predicated region
    $region18: #{tpu_custom_call.1} parent=1 // pred_check
      _
    $region19: #{tpu_custom_call.1} parent=1 // pred_check_branch
      %55 = sbr.rel (0) target = $region21
    $region20: #{tpu_custom_call.1} parent=1 // pred_region
      %57 = dma.done [#allocation6], 768
    $region21: #{tpu_custom_call.1} parent=1 // pred_fallthru
      _
    // Predicated region
    $region22: #{tpu_custom_call.1} parent=1 // pred_check
      _
    $region23: #{tpu_custom_call.1} parent=1 // pred_check_branch
      %59 = sbr.rel (0) target = $region25
    $region24: #{tpu_custom_call.1} parent=1 // pred_region
      %61 = dma.done [#allocation6], 1280
    $region25: #{tpu_custom_call.1} parent=1 // pred_fallthru
      _
    %v63 = vld [vmem:[#allocation2] sm:$0xf]
    %v64 = vld [vmem:[#allocation2 + $0x4] sm:$0xf]
    %v65 = vld [vmem:[#allocation2 + $0x8] sm:$0xf]
    %v66 = vld [vmem:[#allocation2 + $0xc] sm:$0xf]
    %v67 = vld [vmem:[#allocation2 + $0x10] sm:$0xf]
    %v68 = vld [vmem:[#allocation2 + $0x14] sm:$0xf]
    %v69 = vld [vmem:[#allocation2 + $0x18] sm:$0xf]
    %v70 = vld [vmem:[#allocation2 + $0x1c] sm:$0xf]
    %v71 = vld [vmem:[#allocation5] sm:$0xff]
    %v72 = vld [vmem:[#allocation5 + $0x8] sm:$0xff]
    %v73 = vld [vmem:[#allocation5 + $0x10] sm:$0xff]
    %v74 = vld [vmem:[#allocation5 + $0x18] sm:$0xff]
    %v75 = vld [vmem:[#allocation5 + $0x20] sm:$0xff]
    %v76 = vld [vmem:[#allocation5 + $0x28] sm:$0xff]
    %v77 = vld [vmem:[#allocation7] sm:$0xff]
    %v78 = vld [vmem:[#allocation7 + $0x8] sm:$0xff]
    %v79 = vld [vmem:[#allocation7 + $0x10] sm:$0xff]
    %v80 = vld [vmem:[#allocation7 + $0x18] sm:$0xff]
    %v81 = vld [vmem:[#allocation7 + $0x20] sm:$0xff]
    %v82 = vld [vmem:[#allocation7 + $0x28] sm:$0xff]
    %v83 = vld [vmem:[#allocation7 + $0x30] sm:$0xff]
    %v84 = vld [vmem:[#allocation7 + $0x38] sm:$0xff]
    %v85 = vld [vmem:[#allocation7 + $0x40] sm:$0xff]
    %v86 = vld [vmem:[#allocation7 + $0x48] sm:$0xff]
    %v87 = vpack.c.bf16 %v73, %v71
    %v88 = vpack.c.bf16 %v74, %v72
    %v89 = vpack.c.bf16 %v77, %v75
    %v90 = vpack.c.bf16 %v78, %v76
    %v91 = vpack.c.bf16 %v81, %v79
    %v92 = vpack.c.bf16 %v82, %v80
    %v93 = vpack.c.bf16 %v85, %v83
    %v94 = vpack.c.bf16 %v86, %v84
    %v103 = vunpack.c.l.b16 %v63
    %v104 = vunpack.c.l.b16 %v64
    %v105 = vunpack.c.l.b16 %v65
    %v106 = vunpack.c.l.b16 %v66
    %v107 = vunpack.c.l.b16 %v67
    %v108 = vunpack.c.l.b16 %v68
    %v109 = vunpack.c.l.b16 %v69
    %v110 = vunpack.c.l.b16 %v70
    %v111 = vpack.c.b16 %v104, %v103
    %v112 = vpack.c.b16 %v106, %v105
    %v113 = vpack.c.b16 %v108, %v107
    %v114 = vpack.c.b16 %v110, %v109
    %vm115 = vcmask 523264
    %v117 = vsel %vm115, %v111, 0
    %v120 = vsel %vm115, %v112, 0
    %v123 = vsel %vm115, %v113, 0
    %v126 = vsel %vm115, %v114, 0
    %128 = vmatpush.bf16.msra.mxu0 0
    %129 = vmatpush.bf16.msra.mxu0 0
    %130 = vmatpush.bf16.msra.mxu0 0
    %131 = vmatpush.bf16.msra.mxu0 0
    %132 = vmatpush.bf16.msra.mxu0 %v93
    %133 = vmatpush.bf16.msra.mxu0 %v91
    %134 = vmatpush.bf16.msra.mxu0 %v89
    %135 = vmatpush.bf16.msra.mxu0 %v87
    %136 = vmatmul.bf16.gmra.mxu0 %v117
    %v137 = vpop.f32.mrf.mxu0
    %v138 = vadd.f32 0.0, %v137
    %v139 = vpop.f32.mrf.mxu0
    %v140 = vadd.f32 0.0, %v139
    %141 = vmatmul.bf16.gmra.mxu0 %v120
    %v142 = vpop.f32.mrf.mxu0
    %v143 = vadd.f32 0.0, %v142
    %v144 = vpop.f32.mrf.mxu0
    %v145 = vadd.f32 0.0, %v144
    %146 = vmatmul.bf16.gmra.mxu0 %v123
    %v147 = vpop.f32.mrf.mxu0
    %v148 = vadd.f32 0.0, %v147
    %v149 = vpop.f32.mrf.mxu0
    %v150 = vadd.f32 0.0, %v149
    %151 = vmatmul.bf16.gmra.mxu0 %v126
    %v152 = vpop.f32.mrf.mxu0
    %v153 = vadd.f32 0.0, %v152
    %v154 = vpop.f32.mrf.mxu0
    %v155 = vadd.f32 0.0, %v154
    %156 = vdwg.mxu0
    %157 = vmatpush.bf16.msra.mxu0 0
    %158 = vmatpush.bf16.msra.mxu0 0
    %159 = vmatpush.bf16.msra.mxu0 0
    %160 = vmatpush.bf16.msra.mxu0 0
    %161 = vmatpush.bf16.msra.mxu0 %v94
    %162 = vmatpush.bf16.msra.mxu0 %v92
    %163 = vmatpush.bf16.msra.mxu0 %v90
    %164 = vmatpush.bf16.msra.mxu0 %v88
    %165 = vmatmul.bf16.gmra.mxu0 %v117
    %v166 = vpop.f32.mrf.mxu0
    %v167 = vadd.f32 0.0, %v166
    %v168 = vpop.f32.mrf.mxu0
    %v169 = vadd.f32 0.0, %v168
    %170 = vmatmul.bf16.gmra.mxu0 %v120
    %v171 = vpop.f32.mrf.mxu0
    %v172 = vadd.f32 0.0, %v171
    %v173 = vpop.f32.mrf.mxu0
    %v174 = vadd.f32 0.0, %v173
    %175 = vmatmul.bf16.gmra.mxu0 %v123
    %v176 = vpop.f32.mrf.mxu0
    %v177 = vadd.f32 0.0, %v176
    %v178 = vpop.f32.mrf.mxu0
    %v179 = vadd.f32 0.0, %v178
    %180 = vmatmul.bf16.gmra.mxu0 %v126
    %v181 = vpop.f32.mrf.mxu0
    %v182 = vadd.f32 0.0, %v181
    %v183 = vpop.f32.mrf.mxu0
    %v184 = vadd.f32 0.0, %v183
    %185 = vdwg.mxu0
    %v186 = vadd.f32 %v71, %v138
    %v187 = vadd.f32 %v72, %v167
    %v188 = vadd.f32 %v73, %v140
    %v189 = vadd.f32 %v74, %v169
    %v190 = vadd.f32 %v75, %v143
    %v191 = vadd.f32 %v76, %v172
    %v192 = vadd.f32 %v77, %v145
    %v193 = vadd.f32 %v78, %v174
    %v194 = vadd.f32 %v79, %v148
    %v195 = vadd.f32 %v80, %v177
    %v196 = vadd.f32 %v81, %v150
    %v197 = vadd.f32 %v82, %v179
    %v198 = vadd.f32 %v83, %v153
    %v199 = vadd.f32 %v84, %v182
    %v200 = vadd.f32 %v85, %v155
    %v201 = vadd.f32 %v86, %v184
    %v202 = vpack.c.bf16 %v140, %v138
    %v203 = vpack.c.bf16 %v169, %v167
    %v204 = vpack.c.bf16 %v145, %v143
    %v205 = vpack.c.bf16 %v174, %v172
    %v206 = vpack.c.bf16 %v150, %v148
    %v207 = vpack.c.bf16 %v179, %v177
    %v208 = vpack.c.bf16 %v155, %v153
    %v209 = vpack.c.bf16 %v184, %v182
    %210 = vmatpush.bf16.msra.mxu0 0
    %211 = vmatpush.bf16.msra.mxu0 0
    %212 = vmatpush.bf16.msra.mxu0 0
    %213 = vmatpush.bf16.msra.mxu0 0
    %214 = vmatpush.bf16.msra.mxu0 %v208
    %215 = vmatpush.bf16.msra.mxu0 %v206
    %216 = vmatpush.bf16.msra.mxu0 %v204
    %217 = vmatpush.bf16.msra.mxu0 %v202
    %218 = vmatmul.bf16.gmra.mxu0 %v117
    %v219 = vpop.f32.mrf.mxu0
    %v220 = vadd.f32 0.0, %v219
    %v221 = vpop.f32.mrf.mxu0
    %v222 = vadd.f32 0.0, %v221
    %223 = vmatmul.bf16.gmra.mxu0 %v120
    %v224 = vpop.f32.mrf.mxu0
    %v225 = vadd.f32 0.0, %v224
    %v226 = vpop.f32.mrf.mxu0
    %v227 = vadd.f32 0.0, %v226
    %228 = vmatmul.bf16.gmra.mxu0 %v123
    %v229 = vpop.f32.mrf.mxu0
    %v230 = vadd.f32 0.0, %v229
    %v231 = vpop.f32.mrf.mxu0
    %v232 = vadd.f32 0.0, %v231
    %233 = vmatmul.bf16.gmra.mxu0 %v126
    %v234 = vpop.f32.mrf.mxu0
    %v235 = vadd.f32 0.0, %v234
    %v236 = vpop.f32.mrf.mxu0
    %v237 = vadd.f32 0.0, %v236
    %238 = vdwg.mxu0
    %239 = vmatpush.bf16.msra.mxu0 0
    %240 = vmatpush.bf16.msra.mxu0 0
    %241 = vmatpush.bf16.msra.mxu0 0
    %242 = vmatpush.bf16.msra.mxu0 0
    %243 = vmatpush.bf16.msra.mxu0 %v209
    %244 = vmatpush.bf16.msra.mxu0 %v207
    %245 = vmatpush.bf16.msra.mxu0 %v205
    %246 = vmatpush.bf16.msra.mxu0 %v203
    %247 = vmatmul.bf16.gmra.mxu0 %v117
    %v248 = vpop.f32.mrf.mxu0
    %v249 = vadd.f32 0.0, %v248
    %v250 = vpop.f32.mrf.mxu0
    %v251 = vadd.f32 0.0, %v250
    %252 = vmatmul.bf16.gmra.mxu0 %v120
    %v253 = vpop.f32.mrf.mxu0
    %v254 = vadd.f32 0.0, %v253
    %v255 = vpop.f32.mrf.mxu0
    %v256 = vadd.f32 0.0, %v255
    %257 = vmatmul.bf16.gmra.mxu0 %v123
    %v258 = vpop.f32.mrf.mxu0
    %v259 = vadd.f32 0.0, %v258
    %v260 = vpop.f32.mrf.mxu0
    %v261 = vadd.f32 0.0, %v260
    %262 = vmatmul.bf16.gmra.mxu0 %v126
    %v263 = vpop.f32.mrf.mxu0
    %v264 = vadd.f32 0.0, %v263
    %v265 = vpop.f32.mrf.mxu0
    %v266 = vadd.f32 0.0, %v265
    %267 = vdwg.mxu0
    %v268 = vadd.f32 %v186, %v220
    %v269 = vadd.f32 %v187, %v249
    %v270 = vadd.f32 %v188, %v222
    %v271 = vadd.f32 %v189, %v251
    %v272 = vadd.f32 %v190, %v225
    %v273 = vadd.f32 %v191, %v254
    %v274 = vadd.f32 %v192, %v227
    %v275 = vadd.f32 %v193, %v256
    %v276 = vadd.f32 %v194, %v230
    %v277 = vadd.f32 %v195, %v259
    %v278 = vadd.f32 %v196, %v232
    %v279 = vadd.f32 %v197, %v261
    %v280 = vadd.f32 %v198, %v235
    %v281 = vadd.f32 %v199, %v264
    %v282 = vadd.f32 %v200, %v237
    %v283 = vadd.f32 %v201, %v266
    %v284 = vmul.f32 %v268, 0.33333334
    %v285 = vmul.f32 %v269, 0.33333334
    %v286 = vmul.f32 %v270, 0.33333334
    %v287 = vmul.f32 %v271, 0.33333334
    %v288 = vmul.f32 %v272, 0.33333334
    %v289 = vmul.f32 %v273, 0.33333334
    %v290 = vmul.f32 %v274, 0.33333334
    %v291 = vmul.f32 %v275, 0.33333334
    %v292 = vmul.f32 %v276, 0.33333334
    %v293 = vmul.f32 %v277, 0.33333334
    %v294 = vmul.f32 %v278, 0.33333334
    %v295 = vmul.f32 %v279, 0.33333334
    %v296 = vmul.f32 %v280, 0.33333334
    %v297 = vmul.f32 %v281, 0.33333334
    %v298 = vmul.f32 %v282, 0.33333334
    %v299 = vmul.f32 %v283, 0.33333334
    %300 = vst [vmem:[#allocation8] sm:$0xff] %v284
    %301 = vst [vmem:[#allocation8 + $0x8] sm:$0xff] %v285
    %302 = vst [vmem:[#allocation8 + $0x10] sm:$0xff] %v286
    %303 = vst [vmem:[#allocation8 + $0x18] sm:$0xff] %v287
    %304 = vst [vmem:[#allocation8 + $0x20] sm:$0xff] %v288
    %305 = vst [vmem:[#allocation8 + $0x28] sm:$0xff] %v289
    %306 = vst [vmem:[#allocation8 + $0x30] sm:$0xff] %v290
    %307 = vst [vmem:[#allocation8 + $0x38] sm:$0xff] %v291
    %308 = vst [vmem:[#allocation8 + $0x40] sm:$0xff] %v292
    %309 = vst [vmem:[#allocation8 + $0x48] sm:$0xff] %v293
    %310 = vst [vmem:[#allocation8 + $0x50] sm:$0xff] %v294
    %311 = vst [vmem:[#allocation8 + $0x58] sm:$0xff] %v295
    %312 = vst [vmem:[#allocation8 + $0x60] sm:$0xff] %v296
    %313 = vst [vmem:[#allocation8 + $0x68] sm:$0xff] %v297
    %314 = vst [vmem:[#allocation8 + $0x70] sm:$0xff] %v298
    %315 = vst [vmem:[#allocation8 + $0x78] sm:$0xff] %v299
    // Predicated region
    $region26: #{tpu_custom_call.1} parent=1 // pred_check
      _
    $region27: #{tpu_custom_call.1} parent=1 // pred_check_branch
      %317 = sbr.rel (0) target = $region29
    $region28: #{tpu_custom_call.1} parent=1 // pred_region
      %319 = vsyncadd [#allocation4], 0
      %s320 = sshll.u32 [#allocation8], 4
      %s321 = int_to_ptr.vmem [resolvable:$true] %s320
      %s322 = sshll.u32 %s3, 4
      %s323 = int_to_ptr.hbm [resolvable:$true] %s322
      %328 = dma.vmem_to_hbm [thread:$0]  %s321, 2048, %s323, [#allocation4], 256, 256, 16
    $region29: #{tpu_custom_call.1} parent=1 // pred_fallthru
      _
    // Predicated region
    $region30: #{tpu_custom_call.1} parent=1 // pred_check
      _
    $region31: #{tpu_custom_call.1} parent=1 // pred_check_branch
      %330 = sbr.rel (0) target = $region33
    $region32: #{tpu_custom_call.1} parent=1 // pred_region
      %332 = dma.done [#allocation4], 2048
    $region33: #{tpu_custom_call.1} parent=1 // pred_fallthru
      _
    %333 = vsyncpa [#allocation3], 1
    %334 = vsyncpa [#allocation6], 1
    %335 = vsyncpa [#allocation4], 1

</llo_original>
